<compile_context>
chip_gen: v7x
topology: tpu7x:2x2x1
jax: 0.10.0
libtpu: 0.0.40
codegen_flags: <defaults>
</compile_context>

<pallas_src>
import jax
import jax.numpy as jnp
from jax.experimental import pallas as pl
from jax.experimental.pallas import tpu as pltpu


def _discriminator_kernel(x_ref, w1_ref, b1_ref, w2_ref, b2_ref,
                          latent_ref, out_ref):
    # x:  (TILE_B, D) bf16    w1: (D, H) bf16    b1: (1, H) f32
    # w2: (1, H) f32          b2: (1, 1) f32 in SMEM
    # encoder: Linear + ReLU  (MXU matmul, f32 accumulate, f32 elementwise)
    h = jnp.dot(x_ref[...], w1_ref[...], preferred_element_type=jnp.float32)
    h = h + b1_ref[...]                       # (1, H) broadcast over batch tile
    h = jnp.maximum(h, 0.0)                   # act_fun = nn.ReLU()
    latent_ref[...] = h.astype(latent_ref.dtype)

    # classifier: Linear(H, 1) + Sigmoid.
    # N=1 matmul would waste the MXU; do it on the VPU (mul) + XLU (reduce).
    logits = jnp.sum(h * w2_ref[...], axis=-1, keepdims=True) + b2_ref[0, 0]
    # sigmoid = 1 / (1 + exp(-x)): exp on the EUP, approx reciprocal on the EUP.
    prob = pl.reciprocal(1.0 + jnp.exp(-logits), approx=True)
    out_ref[...] = prob.astype(out_ref.dtype)


def prepare_params(w1, b1, w2, b2, mxu_dtype=jnp.bfloat16):
    """One-time weight layout/dtype prep (do NOT redo this every forward).

    w1: (H, D), b1: (H,), w2: (1, H), b2: (1,)  (PyTorch nn.Linear layout).
    """
    H, D = w1.shape
    w1_t = jnp.asarray(w1).astype(mxu_dtype).T          # (D, H)  MXU operand
    b1_r = jnp.asarray(b1, jnp.float32).reshape(1, H)    # (1, H)  f32 elementwise
    w2_r = jnp.asarray(w2, jnp.float32).reshape(1, H)    # (1, H)  VPU row
    b2_r = jnp.asarray(b2, jnp.float32).reshape(1, 1)    # (1, 1)  SMEM scalar
    return (w1_t, b1_r, w2_r, b2_r)


def _pick_tile_b(B, max_tile=256):
    if B <= max_tile:
        return B
    # largest multiple of 8 that evenly divides B (keeps blocks non-ragged)
    for t in range(max_tile, 7, -8):
        if B % t == 0:
            return t
    return B  # odd batch: single block rather than ragged tiles


def discriminator_forward(x, params, tile_b=None):
    """x: (B, D) float.  params: output of prepare_params.

    Returns (latent_vector (B, H), output (B, 1)) — same as the PyTorch module.
    """
    w1_t, b1_r, w2_r, b2_r = params
    B, D = x.shape
    H = w1_t.shape[1]
    mxu_dtype = w1_t.dtype

    if tile_b is None:
        tile_b = _pick_tile_b(B)
    else:
        tile_b = min(tile_b, B)
        if B % tile_b != 0:
            tile_b = _pick_tile_b(B, max_tile=tile_b)
    grid = (B // tile_b,)

    x_mxu = jnp.asarray(x).astype(mxu_dtype)

    # Explicit VMEM budget (sized for v7x's 64 MiB physical / 32 MiB default):
    # double-buffered x/latent/out tiles + resident w1/b1/w2, with 2x headroom.
    mxu_bytes = jnp.dtype(mxu_dtype).itemsize
    est = (2 * tile_b * (D * mxu_bytes + H * 4 + 4)
           + D * H * mxu_bytes + 2 * H * 4)
    vmem_limit = int(min(max(2 * est, 4 << 20), 48 << 20))

    latent, out = pl.pallas_call(
        _discriminator_kernel,
        out_shape=(
            jax.ShapeDtypeStruct((B, H), jnp.float32),
            jax.ShapeDtypeStruct((B, 1), jnp.float32),
        ),
        grid=grid,
        in_specs=[
            pl.BlockSpec((tile_b, D), lambda i: (i, 0)),        # x: batch-tiled
            pl.BlockSpec((D, H), lambda i: (0, 0)),             # w1: VMEM-resident
            pl.BlockSpec((1, H), lambda i: (0, 0)),             # b1: resident
            pl.BlockSpec((1, H), lambda i: (0, 0)),             # w2 row: resident
            pl.BlockSpec(memory_space=pltpu.MemorySpace.SMEM),  # b2: SMEM scalar
        ],
        out_specs=(
            pl.BlockSpec((tile_b, H), lambda i: (i, 0)),        # latent
            pl.BlockSpec((tile_b, 1), lambda i: (i, 0)),        # prob (masked vst, tiny)
        ),
        compiler_params=pltpu.CompilerParams(
            dimension_semantics=("parallel",),
            vmem_limit_bytes=vmem_limit,
        ),
    )(x_mxu, w1_t, b1_r, w2_r, b2_r)
    return latent, out


def init_params(key, input_size):
    """Deterministic init mimicking nn.Linear's U(-1/sqrt(fan_in), 1/sqrt(fan_in))."""
    hidden_size = input_size // 2
    k1, k2, k3, k4 = jax.random.split(key, 4)
    lim1 = 1.0 / jnp.sqrt(jnp.float32(input_size))
    lim2 = 1.0 / jnp.sqrt(jnp.float32(hidden_size))
    w1 = jax.random.uniform(k1, (hidden_size, input_size), jnp.float32, -lim1, lim1)
    b1 = jax.random.uniform(k2, (hidden_size,), jnp.float32, -lim1, lim1)
    w2 = jax.random.uniform(k3, (1, hidden_size), jnp.float32, -lim2, lim2)
    b2 = jax.random.uniform(k4, (1,), jnp.float32, -lim2, lim2)
    return w1, b1, w2, b2


if __name__ == "__main__":
    key = jax.random.PRNGKey(0)
    kx, kp = jax.random.split(key)

    batch = 64
    input_size = 256          # -> hidden_size = 128 (lane-aligned)

    x = jax.random.normal(kx, (batch, input_size), jnp.float32)
    w1, b1, w2, b2 = init_params(kp, input_size)
    params = prepare_params(w1, b1, w2, b2)     # transpose/cast ONCE

    # tile_b=32 -> grid=(2,) so the batch pipeline is actually exercised.
    latent, out = discriminator_forward(x, params, tile_b=32)
    jax.block_until_ready((latent, out))

    # Reference: same math in plain JAX, with the same bf16 MXU-operand cast.
    x_q = x.astype(jnp.bfloat16).astype(jnp.float32)
    w1_q = w1.astype(jnp.bfloat16).astype(jnp.float32)
    lat_ref = jnp.maximum(x_q @ w1_q.T + b1, 0.0)
    logits_ref = jnp.sum(lat_ref * w2, axis=-1, keepdims=True) + b2
    out_ref = jax.nn.sigmoid(logits_ref)

    assert latent.shape == (batch, input_size // 2)
    assert out.shape == (batch, 1)
    assert jnp.allclose(latent, lat_ref, atol=1e-3, rtol=1e-3), "latent mismatch"
    assert jnp.allclose(out, out_ref, atol=1e-2), "output mismatch"

    print("KERNEL_OK")
</pallas_src>

<mosaic_0001>
module attributes {stable_mosaic.version = 11 : i64} {
  func.func @_discriminator_kernel(%arg0: i32, %arg1: memref<32x256xbf16, #tpu.memory_space<vmem>>, %arg2: memref<256x128xbf16, #tpu.memory_space<vmem>>, %arg3: memref<1x128xf32, #tpu.memory_space<vmem>>, %arg4: memref<1x128xf32, #tpu.memory_space<vmem>>, %arg5: memref<1x1xf32, #tpu.memory_space<smem>>, %arg6: memref<32x128xf32, #tpu.memory_space<vmem>>, %arg7: memref<32x1xf32, #tpu.memory_space<vmem>>) attributes {dimension_semantics = [#tpu.dimension_semantics<parallel>], iteration_bounds = array<i64: 2>, scalar_prefetch = 0 : i64, scratch_operands = 0 : i64, tpu.core_type = #tpu.core_type<tc>, window_params = [{transform_indices = @transform_0, window_bounds = array<i64: 32, 256>}, {pipeline_mode = #tpu.pipeline_mode<synchronous>, transform_indices = @transform_1, window_bounds = array<i64: 256, 128>}, {pipeline_mode = #tpu.pipeline_mode<synchronous>, transform_indices = @transform_2, window_bounds = array<i64: 1, 128>}, {pipeline_mode = #tpu.pipeline_mode<synchronous>, transform_indices = @transform_3, window_bounds = array<i64: 1, 128>}, {transform_indices = @transform_4, window_bounds = array<i64: 1, 1>}, {transform_indices = @transform_5, window_bounds = array<i64: 32, 128>}, {transform_indices = @transform_6, window_bounds = array<i64: 32, 1>}]} {
    %c0 = arith.constant 0 : index
    %c0_0 = arith.constant 0 : index
    %0 = vector.load %arg1[%c0, %c0_0] : memref<32x256xbf16, #tpu.memory_space<vmem>>, vector<32x256xbf16>
    %c0_1 = arith.constant 0 : index
    %c0_2 = arith.constant 0 : index
    %1 = vector.load %arg2[%c0_1, %c0_2] : memref<256x128xbf16, #tpu.memory_space<vmem>>, vector<256x128xbf16>
    %cst = arith.constant dense<0.000000e+00> : vector<32x128xf32>
    %2 = tpu.matmul %0, %1, %cst {dimension_numbers = #tpu.dot_dimension_numbers<[1], [0], [0], [1], [0, 0, 1, 1], [], []>} : vector<32x256xbf16>, vector<256x128xbf16>, vector<32x128xf32> -> vector<32x128xf32>
    %c0_3 = arith.constant 0 : index
    %c0_4 = arith.constant 0 : index
    %3 = vector.load %arg3[%c0_3, %c0_4] : memref<1x128xf32, #tpu.memory_space<vmem>>, vector<1x128xf32>
    %4 = vector.broadcast %3 : vector<1x128xf32> to vector<32x128xf32>
    %5 = arith.addf %2, %4 : vector<32x128xf32>
    %cst_5 = arith.constant 0.000000e+00 : f32
    %6 = vector.broadcast %cst_5 : f32 to vector<32x128xf32>
    %7 = arith.maximumf %5, %6 : vector<32x128xf32>
    %c0_6 = arith.constant 0 : index
    %c0_7 = arith.constant 0 : index
    %8 = vector.load %arg6[%c0_6, %c0_7] : memref<32x128xf32, #tpu.memory_space<vmem>>, vector<32x128xf32>
    tpu.vector_store %arg6[%c0_6, %c0_7], %7 {strides = array<i32>} : memref<32x128xf32, #tpu.memory_space<vmem>>, vector<32x128xf32>,
    %c0_8 = arith.constant 0 : index
    %c0_9 = arith.constant 0 : index
    %9 = vector.load %arg4[%c0_8, %c0_9] : memref<1x128xf32, #tpu.memory_space<vmem>>, vector<1x128xf32>
    %10 = vector.broadcast %9 : vector<1x128xf32> to vector<32x128xf32>
    %11 = arith.mulf %7, %10 : vector<32x128xf32>
    %cst_10 = arith.constant dense<0.000000e+00> : vector<32xf32>
    %12 = vector.multi_reduction <add>, %11, %cst_10 [1] : vector<32x128xf32> to vector<32xf32>
    %13 = vector.shape_cast %12 : vector<32xf32> to vector<32x1xf32>
    %c0_11 = arith.constant 0 : index
    %c0_12 = arith.constant 0 : index
    %14 = memref.load %arg5[%c0_11, %c0_12] : memref<1x1xf32, #tpu.memory_space<smem>>
    %15 = vector.broadcast %14 : f32 to vector<32x1xf32>
    %16 = arith.addf %13, %15 : vector<32x1xf32>
    %cst_13 = arith.constant 0.000000e+00 : f32
    %17 = vector.broadcast %cst_13 : f32 to vector<32x1xf32>
    %18 = arith.subf %17, %16 : vector<32x1xf32>
    %19 = math.exp %18 : vector<32x1xf32>
    %cst_14 = arith.constant 1.000000e+00 : f32
    %20 = vector.broadcast %cst_14 : f32 to vector<32x1xf32>
    %21 = arith.addf %20, %19 : vector<32x1xf32>
    %22 = tpu.reciprocal %21 {approx = true} : vector<32x1xf32> -> vector<32x1xf32>
    %c0_15 = arith.constant 0 : index
    %c0_16 = arith.constant 0 : index
    %23 = vector.load %arg7[%c0_15, %c0_16] : memref<32x1xf32, #tpu.memory_space<vmem>>, vector<32x1xf32>
    tpu.vector_store %arg7[%c0_15, %c0_16], %22 {strides = array<i32>} : memref<32x1xf32, #tpu.memory_space<vmem>>, vector<32x1xf32>,
    return
  }
  func.func @transform_0(%arg0: i32) -> (i32, i32) {
    %c0_i32 = arith.constant 0 : i32
    %c0_i32_0 = arith.constant 0 : i32
    return %arg0, %c0_i32 : i32, i32
  }
  func.func @transform_1(%arg0: i32) -> (i32, i32) {
    %c0_i32 = arith.constant 0 : i32
    %c0_i32_0 = arith.constant 0 : i32
    %c0_i32_1 = arith.constant 0 : i32
    return %c0_i32, %c0_i32_0 : i32, i32
  }
  func.func @transform_2(%arg0: i32) -> (i32, i32) {
    %c0_i32 = arith.constant 0 : i32
    %c0_i32_0 = arith.constant 0 : i32
    %c0_i32_1 = arith.constant 0 : i32
    return %c0_i32, %c0_i32_0 : i32, i32
  }
  func.func @transform_3(%arg0: i32) -> (i32, i32) {
    %c0_i32 = arith.constant 0 : i32
    %c0_i32_0 = arith.constant 0 : i32
    %c0_i32_1 = arith.constant 0 : i32
    return %c0_i32, %c0_i32_0 : i32, i32
  }
  func.func @transform_4(%arg0: i32) -> (i32, i32) {
    %c0_i32 = arith.constant 0 : i32
    %c0_i32_0 = arith.constant 0 : i32
    %c0_i32_1 = arith.constant 0 : i32
    return %c0_i32, %c0_i32_0 : i32, i32
  }
  func.func @transform_5(%arg0: i32) -> (i32, i32) {
    %c0_i32 = arith.constant 0 : i32
    %c0_i32_0 = arith.constant 0 : i32
    return %arg0, %c0_i32 : i32, i32
  }
  func.func @transform_6(%arg0: i32) -> (i32, i32) {
    %c0_i32 = arith.constant 0 : i32
    %c0_i32_0 = arith.constant 0 : i32
    return %arg0, %c0_i32 : i32, i32
  }
}

</mosaic_0001>

<llo_original>
// kernel: tpu_custom_call.1
$region0: #{tpu_custom_call.1}
  #allocation0 [shape = 'u32[]', space=smem, size = 0x4, offset = 0x4, fixed_abs, tag = 'smem constant byte address 0x4 - core index']
  #allocation1 [shape = 'u32[144,128]{1,0:T(1,128)}', space=vmem, size = 0x12000, scoped, tag = 'internal scratch']
  #allocation2 [shape = 'f32[1,1]{1,0:T(1,128)S(6)}', space=smem, size = 0x200, scoped, tag = 'scoped memory for tpu_custom_call.1']
  %s0 = inlined_call_operand.hbm [shape: bf16[64,256], index: 0, kind: input, shape index: {}]
  %s1 = inlined_call_operand.hbm [shape: bf16[256,128], index: 1, kind: input, shape index: {}]
  %s2 = inlined_call_operand.vmem [shape: f32[1,128], index: 2, kind: input, shape index: {}]
  %s3 = inlined_call_operand.vmem [shape: f32[1,128], index: 3, kind: input, shape index: {}]
  %s4 = inlined_call_operand.<no memory space> [shape: f32[1,1], index: 4, kind: input, shape index: {}]
  %s5 = inlined_call_operand.hbm [shape: f32[64,128], index: 5, kind: output, shape index: {0}]
  %s6 = inlined_call_operand.vmem [shape: f32[64,1], index: 6, kind: output, shape index: {1}]
  %7 = xla_tuple %s5, %s6
  %s8 = sld [smem:[#allocation0]]
  $region69: #{tpu_custom_call.1} parent=0
    _
  %s10 = ssub.s32 1, %s8
  %s11 = scalar_select 0, %s10, %s8
  %12 = sst [smem:[#allocation2]] %s4
  $region1: #{tpu_custom_call.1} parent=0
    #allocation3 [shape = 'u8[32768]{0}', space=vmem, size = 0x8000, scoped, tag = 'input window, operand 0']
    #allocation4 [shape = 's32[2]{0}', space=sflag, size = 0x8, scoped, tag = 'scoped memory for tpu_custom_call.1']
    #allocation5 [shape = 's32[2]{0}', space=sflag, size = 0x8, scoped, tag = 'scoped memory for tpu_custom_call.1']
    #allocation6 [shape = 'u8[65536]{0}', space=vmem, size = 0x10000, scoped, tag = 'input window, operand 1, single buffered']
    #allocation7 [shape = 's32[1]{0}', space=sflag, size = 0x4, scoped, tag = 'scoped memory for tpu_custom_call.1']
    #allocation8 [shape = 'u8[32768]{0}', space=vmem, size = 0x8000, scoped, tag = 'output window, operand 0']
    %13 = vsyncpa [#allocation4], 0
    %s14 = scalar_lea.sflag [#allocation4], 1
    %15 = vsyncpa %s14, 0
    %16 = vsyncpa [#allocation7], 0
    %17 = vsyncpa [#allocation5], 0
    %s18 = scalar_lea.sflag [#allocation5], 1
    %19 = vsyncpa %s18, 0
    loop: start=0, step=1, limit=4
    $region2: #{tpu_custom_call.1} parent=1 // loop_pre_header
      _
    $region3: #{tpu_custom_call.1} parent=1 // loop_header
      %s21 = sphi 0, %s25
      %p22 = scmp.ge.s32.totalorder %s21, 4
      %s31 = sphi 0, %s33
      %s34 = sphi 0, %s31
      %s35 = sphi 0, %s34
      %s51 = sphi 0, %s35
      %s55 = sphi 0, %s55
      %s57 = sphi 0, %s55
      %s58 = sphi 0, %s57
      %s72 = sphi 0, %s58
      %s76 = sphi 0, %s76
      %s78 = sphi 0, %s76
      %s79 = sphi 0, %s78
      %s93 = sphi 0, %s79
      %s97 = sphi 0, %s97
      %s99 = sphi 0, %s97
      %s100 = sphi 0, %s99
      %s114 = sphi 0, %s100
      %s118 = sphi 0, %s118
      %s120 = sphi 0, %s118
      %s121 = sphi 0, %s120
      %s135 = sphi 0, %s121
      %s141 = sphi 0, %s143
      %s144 = sphi 0, %s141
      %s145 = sphi 0, %s144
      %s161 = sphi 0, %s145
      %s167 = sphi 0, %s169
      %s170 = sphi 0, %s167
      %s171 = sphi 0, %s170
      %s187 = sphi 0, %s171
    $region4: #{tpu_custom_call.1} parent=1 // loop_header_branch
      %24 = sbr.rel (%p22) target = $region8
    $region5: #{tpu_custom_call.1} parent=1 // loop_body
      %s26 = ssub.s32 %s21, 1
      %s27 = ssub.s32 %s21, 2
      %s28 = sadd.s32 %s21, 1
      %s29 = ssub.s32 %s21, %s28
      %p30 = scmp.eq.s32.totalorder %s29, 0
      %s32 = sadd.s32 %s31, 1
      %s33 = scalar_select %p30, %s31, %s32
      %p36 = pneg %p30
      %p37 = scmp.eq.s32.totalorder %s21, 1
      %p38 = por %p36, %p37
      %p39 = scmp.ne.s32.totalorder %s31, %s34
      %p40 = scmp.eq.s32.totalorder %s21, 0
      %p41 = por %p39, %p40
      %p42 = scmp.ne.s32.totalorder %s31, %s34
      %p43 = scmp.eq.s32.totalorder %s26, 1
      %p44 = por %p42, %p43
      %p45 = scmp.ne.s32.totalorder %s34, %s35
      %p46 = scmp.eq.s32.totalorder %s26, 0
      %p47 = por %p45, %p46
      %p48 = scmp.ne.s32.totalorder %s34, %s35
      %p49 = scmp.eq.s32.totalorder %s27, 1
      %p50 = por %p48, %p49
      %p52 = scmp.ne.s32.totalorder %s35, %s51
      %p53 = scmp.eq.s32.totalorder %s27, 0
      %p54 = por %p52, %p53
      %s56 = sadd.s32 %s55, 1
      %p59 = scmp.eq.s32.totalorder %s21, 1
      %p60 = scmp.ne.s32.totalorder %s55, %s57
      %p61 = scmp.eq.s32.totalorder %s21, 0
      %p62 = por %p60, %p61
      %p63 = scmp.ne.s32.totalorder %s55, %s57
      %p64 = scmp.eq.s32.totalorder %s26, 1
      %p65 = por %p63, %p64
      %p66 = scmp.ne.s32.totalorder %s57, %s58
      %p67 = scmp.eq.s32.totalorder %s26, 0
      %p68 = por %p66, %p67
      %p69 = scmp.ne.s32.totalorder %s57, %s58
      %p70 = scmp.eq.s32.totalorder %s27, 1
      %p71 = por %p69, %p70
      %p73 = scmp.ne.s32.totalorder %s58, %s72
      %p74 = scmp.eq.s32.totalorder %s27, 0
      %p75 = por %p73, %p74
      %s77 = sadd.s32 %s76, 1
      %p80 = scmp.eq.s32.totalorder %s21, 1
      %p81 = scmp.ne.s32.totalorder %s76, %s78
      %p82 = scmp.eq.s32.totalorder %s21, 0
      %p83 = por %p81, %p82
      %p84 = scmp.ne.s32.totalorder %s76, %s78
      %p85 = scmp.eq.s32.totalorder %s26, 1
      %p86 = por %p84, %p85
      %p87 = scmp.ne.s32.totalorder %s78, %s79
      %p88 = scmp.eq.s32.totalorder %s26, 0
      %p89 = por %p87, %p88
      %p90 = scmp.ne.s32.totalorder %s78, %s79
      %p91 = scmp.eq.s32.totalorder %s27, 1
      %p92 = por %p90, %p91
      %p94 = scmp.ne.s32.totalorder %s79, %s93
      %p95 = scmp.eq.s32.totalorder %s27, 0
      %p96 = por %p94, %p95
      %s98 = sadd.s32 %s97, 1
      %p101 = scmp.eq.s32.totalorder %s21, 1
      %p102 = scmp.ne.s32.totalorder %s97, %s99
      %p103 = scmp.eq.s32.totalorder %s21, 0
      %p104 = por %p102, %p103
      %p105 = scmp.ne.s32.totalorder %s97, %s99
      %p106 = scmp.eq.s32.totalorder %s26, 1
      %p107 = por %p105, %p106
      %p108 = scmp.ne.s32.totalorder %s99, %s100
      %p109 = scmp.eq.s32.totalorder %s26, 0
      %p110 = por %p108, %p109
      %p111 = scmp.ne.s32.totalorder %s99, %s100
      %p112 = scmp.eq.s32.totalorder %s27, 1
      %p113 = por %p111, %p112
      %p115 = scmp.ne.s32.totalorder %s100, %s114
      %p116 = scmp.eq.s32.totalorder %s27, 0
      %p117 = por %p115, %p116
      %s119 = sadd.s32 %s118, 1
      %p122 = scmp.eq.s32.totalorder %s21, 1
      %p123 = scmp.ne.s32.totalorder %s118, %s120
      %p124 = scmp.eq.s32.totalorder %s21, 0
      %p125 = por %p123, %p124
      %p126 = scmp.ne.s32.totalorder %s118, %s120
      %p127 = scmp.eq.s32.totalorder %s26, 1
      %p128 = por %p126, %p127
      %p129 = scmp.ne.s32.totalorder %s120, %s121
      %p130 = scmp.eq.s32.totalorder %s26, 0
      %p131 = por %p129, %p130
      %p132 = scmp.ne.s32.totalorder %s120, %s121
      %p133 = scmp.eq.s32.totalorder %s27, 1
      %p134 = por %p132, %p133
      %p136 = scmp.ne.s32.totalorder %s121, %s135
      %p137 = scmp.eq.s32.totalorder %s27, 0
      %p138 = por %p136, %p137
      %s139 = ssub.s32 %s21, %s28
      %p140 = scmp.eq.s32.totalorder %s139, 0
      %s142 = sadd.s32 %s141, 1
      %s143 = scalar_select %p140, %s141, %s142
      %p146 = pneg %p140
      %p147 = scmp.eq.s32.totalorder %s21, 1
      %p148 = por %p146, %p147
      %p149 = scmp.ne.s32.totalorder %s141, %s144
      %p150 = scmp.eq.s32.totalorder %s21, 0
      %p151 = por %p149, %p150
      %p152 = scmp.ne.s32.totalorder %s141, %s144
      %p153 = scmp.eq.s32.totalorder %s26, 1
      %p154 = por %p152, %p153
      %p155 = scmp.ne.s32.totalorder %s144, %s145
      %p156 = scmp.eq.s32.totalorder %s26, 0
      %p157 = por %p155, %p156
      %p158 = scmp.ne.s32.totalorder %s144, %s145
      %p159 = scmp.eq.s32.totalorder %s27, 1
      %p160 = por %p158, %p159
      %p162 = scmp.ne.s32.totalorder %s145, %s161
      %p163 = scmp.eq.s32.totalorder %s27, 0
      %p164 = por %p162, %p163
      %s165 = ssub.s32 %s21, %s28
      %p166 = scmp.eq.s32.totalorder %s165, 0
      %s168 = sadd.s32 %s167, 1
      %s169 = scalar_select %p166, %s167, %s168
      %p172 = pneg %p166
      %p173 = scmp.eq.s32.totalorder %s21, 1
      %p174 = por %p172, %p173
      %p175 = scmp.ne.s32.totalorder %s167, %s170
      %p176 = scmp.eq.s32.totalorder %s21, 0
      %p177 = por %p175, %p176
      %p178 = scmp.ne.s32.totalorder %s167, %s170
      %p179 = scmp.eq.s32.totalorder %s26, 1
      %p180 = por %p178, %p179
      %p181 = scmp.ne.s32.totalorder %s170, %s171
      %p182 = scmp.eq.s32.totalorder %s26, 0
      %p183 = por %p181, %p182
      %p184 = scmp.ne.s32.totalorder %s170, %s171
      %p185 = scmp.eq.s32.totalorder %s27, 1
      %p186 = por %p184, %p185
      %p188 = scmp.ne.s32.totalorder %s171, %s187
      %p189 = scmp.eq.s32.totalorder %s27, 0
      %p190 = por %p188, %p189
      %p191 = scmp.le.s32.totalorder 1, %s21
      %p192 = scmp.lt.s32.totalorder %s21, 3
      %p193 = pnand %p191, %p192
      %p194 = pneg %p193
      // Predicated region
      $region9: #{tpu_custom_call.1} parent=5 // pred_check
        _
      $region10: #{tpu_custom_call.1} parent=5 // pred_check_branch
        %196 = sbr.rel (%p193) target = $region12
      $region11: #{tpu_custom_call.1} parent=5 // pred_region
        %s197 = ssub.s32 %s21, 1
        // Predicated region
        $region13: #{tpu_custom_call.1} parent=11 // pred_check
          %p198 = pneg %p68
        $region14: #{tpu_custom_call.1} parent=11 // pred_check_branch
          %200 = sbr.rel (%p198) target = $region16
        $region15: #{tpu_custom_call.1} parent=11 // pred_region
          %s202 = ssub.s32 2048, 2048
          %203 = vsyncadd [#allocation7], %s202
          %s204 = sshll.u32 [#allocation6], 4
          %s205 = int_to_ptr.vmem [resolvable:$true] %s204
          %210 = dma.hbm_to_vmem [thread:$0]  %s1, 2048, %s205, [#allocation7], 64, 64, 4
        $region16: #{tpu_custom_call.1} parent=11 // pred_fallthru
          _
        // Predicated region
        $region17: #{tpu_custom_call.1} parent=11 // pred_check
          %p211 = pneg %p89
        $region18: #{tpu_custom_call.1} parent=11 // pred_check_branch
          %213 = sbr.rel (%p211) target = $region20
        $region19: #{tpu_custom_call.1} parent=11 // pred_region
          _
        $region20: #{tpu_custom_call.1} parent=11 // pred_fallthru
          _
        // Predicated region
        $region21: #{tpu_custom_call.1} parent=11 // pred_check
          %p214 = pneg %p110
        $region22: #{tpu_custom_call.1} parent=11 // pred_check_branch
          %216 = sbr.rel (%p214) target = $region24
        $region23: #{tpu_custom_call.1} parent=11 // pred_region
          _
        $region24: #{tpu_custom_call.1} parent=11 // pred_fallthru
          _
        // Predicated region
        $region25: #{tpu_custom_call.1} parent=11 // pred_check
          %p217 = pneg %p131
        $region26: #{tpu_custom_call.1} parent=11 // pred_check_branch
          %219 = sbr.rel (%p217) target = $region28
        $region27: #{tpu_custom_call.1} parent=11 // pred_region
          _
        $region28: #{tpu_custom_call.1} parent=11 // pred_fallthru
          _
      $region12: #{tpu_custom_call.1} parent=5 // pred_fallthru
        _
      %p220 = scmp.lt.s32.totalorder %s21, 2
      // Predicated region
      $region29: #{tpu_custom_call.1} parent=5 // pred_check
        %p221 = pneg %p220
      $region30: #{tpu_custom_call.1} parent=5 // pred_check_branch
        %223 = sbr.rel (%p221) target = $region32
      $region31: #{tpu_custom_call.1} parent=5 // pred_region
        // Predicated region
        $region33: #{tpu_custom_call.1} parent=31 // pred_check
          %p224 = pneg %p41
        $region34: #{tpu_custom_call.1} parent=31 // pred_check_branch
          %226 = sbr.rel (%p224) target = $region36
        $region35: #{tpu_custom_call.1} parent=31 // pred_region
          %s227 = sand.u32 %s31, 1
          %s228 = scalar_lea.sflag [#allocation4], %s227
          %s229 = sand.u32 %s31, 1
          %s230 = smul.addr %s229, 32
          %s231 = scalar_lea.vmem [#allocation3], %s230
          %s232 = smul.u32 4, %s21
          %s234 = ssub.s32 512, 512
          %235 = vsyncadd %s228, %s234
          %s236 = smul.addr %s232, 2
          %s237 = smul.addr %s236, 64
          %s238 = scalar_lea.hbm %s0, %s237
          %s239 = sshll.u32 %s231, 4
          %s240 = int_to_ptr.vmem [resolvable:$true] %s239
          %245 = dma.hbm_to_vmem [thread:$0]  %s238, 512, %s240, %s228, 128, 128, 8
        $region36: #{tpu_custom_call.1} parent=31 // pred_fallthru
          _
      $region32: #{tpu_custom_call.1} parent=5 // pred_fallthru
        _
      %p246 = scmp.le.s32.totalorder 1, %s21
      %p247 = scmp.lt.s32.totalorder %s21, 3
      %p248 = pnand %p246, %p247
      %p249 = pneg %p248
      // Predicated region
      $region37: #{tpu_custom_call.1} parent=5 // pred_check
        _
      $region38: #{tpu_custom_call.1} parent=5 // pred_check_branch
        %251 = sbr.rel (%p248) target = $region40
      $region39: #{tpu_custom_call.1} parent=5 // pred_region
        %s252 = ssub.s32 %s21, 1
        %s253 = sand.u32 %s34, 1
        %s254 = scalar_lea.sflag [#allocation4], %s253
        %s255 = sand.u32 %s34, 1
        %s256 = smul.addr %s255, 32
        %s257 = scalar_lea.vmem [#allocation3], %s256
        // Predicated region
        $region41: #{tpu_custom_call.1} parent=39 // pred_check
          %p258 = pneg %p47
        $region42: #{tpu_custom_call.1} parent=39 // pred_check_branch
          %260 = sbr.rel (%p258) target = $region44
        $region43: #{tpu_custom_call.1} parent=39 // pred_region
          %261 = dma.done %s254, 512
        $region44: #{tpu_custom_call.1} parent=39 // pred_fallthru
          _
        // Predicated region
        $region45: #{tpu_custom_call.1} parent=39 // pred_check
          %p262 = pneg %p68
        $region46: #{tpu_custom_call.1} parent=39 // pred_check_branch
          %264 = sbr.rel (%p262) target = $region48
        $region47: #{tpu_custom_call.1} parent=39 // pred_region
          %265 = dma.done [#allocation7], 2048
        $region48: #{tpu_custom_call.1} parent=39 // pred_fallthru
          _
        %s266 = sand.u32 %s34, 1
        %s267 = scalar_lea.sflag [#allocation4], %s266
        %s268 = sand.u32 %s34, 1
        %s269 = smul.addr %s268, 32
        %s270 = scalar_lea.vmem [#allocation3], %s269
        %p271 = pneg %p47
        %p272 = pneg %p44
        %p273 = pneg %p68
        %p274 = pneg %p65
        %p275 = pneg %p89
        %p276 = pneg %p86
        %p277 = pneg %p110
        %p278 = pneg %p107
        %p279 = pneg %p131
        %p280 = pneg %p128
        %p281 = pneg %p157
        %p282 = pneg %p154
        %s283 = sand.u32 %s144, 1
        %s284 = scalar_lea.sflag [#allocation5], %s283
        %s285 = sand.u32 %s144, 1
        %s286 = smul.addr %s285, 32
        %s287 = scalar_lea.vmem [#allocation8], %s286
        %p288 = pneg %p183
        %p289 = pneg %p180
        %s290 = smul.u32 4, %s26
        %p291 = scmp.lt.s32.totalorder %s290, 7
        %s292 = scalar_select %p291, %s290, 7
        %s293 = smul.addr %s292, 8
        %s294 = scalar_lea.vmem %s6, %s293
        %s295 = smul.u32 4, %s26
        %s296 = smul.u32 4, %s26
        %s297 = smul.u32 4, %s26
        %p298 = scmp.lt.s32.totalorder %s297, 7
        %s299 = scalar_select %p298, %s297, 7
        %s300 = smul.addr %s299, 8
        %s301 = scalar_lea.vmem %s6, %s300
        %s302 = smul.u32 4, %s26
        %v304 = vld [vmem:[%s257] sm:$0xff]
        %v305 = vld [vmem:[%s257 + $0x8] sm:$0xff]
        %v306 = vld [vmem:[%s257 + $0x10] sm:$0xff]
        %v307 = vld [vmem:[%s257 + $0x18] sm:$0xff]
        %v308 = vld [vmem:[#allocation6] sm:$0xf]
        %v309 = vld [vmem:[#allocation6 + $0x4] sm:$0xf]
        %v310 = vld [vmem:[#allocation6 + $0x8] sm:$0xf]
        %v311 = vld [vmem:[#allocation6 + $0xc] sm:$0xf]
        %v312 = vld [vmem:[#allocation6 + $0x10] sm:$0xf]
        %v313 = vld [vmem:[#allocation6 + $0x14] sm:$0xf]
        %v314 = vld [vmem:[#allocation6 + $0x18] sm:$0xf]
        %v315 = vld [vmem:[#allocation6 + $0x1c] sm:$0xf]
        %v316 = vld [vmem:[#allocation6 + $0x20] sm:$0xf]
        %v317 = vld [vmem:[#allocation6 + $0x24] sm:$0xf]
        %v318 = vld [vmem:[#allocation6 + $0x28] sm:$0xf]
        %v319 = vld [vmem:[#allocation6 + $0x2c] sm:$0xf]
        %v320 = vld [vmem:[#allocation6 + $0x30] sm:$0xf]
        %v321 = vld [vmem:[#allocation6 + $0x34] sm:$0xf]
        %v322 = vld [vmem:[#allocation6 + $0x38] sm:$0xf]
        %v323 = vld [vmem:[#allocation6 + $0x3c] sm:$0xf]
        %v324 = vld [vmem:[#allocation6 + $0x40] sm:$0xf]
        %v325 = vld [vmem:[#allocation6 + $0x44] sm:$0xf]
        %v326 = vld [vmem:[#allocation6 + $0x48] sm:$0xf]
        %v327 = vld [vmem:[#allocation6 + $0x4c] sm:$0xf]
        %v328 = vld [vmem:[#allocation6 + $0x50] sm:$0xf]
        %v329 = vld [vmem:[#allocation6 + $0x54] sm:$0xf]
        %v330 = vld [vmem:[#allocation6 + $0x58] sm:$0xf]
        %v331 = vld [vmem:[#allocation6 + $0x5c] sm:$0xf]
        %v332 = vld [vmem:[#allocation6 + $0x60] sm:$0xf]
        %v333 = vld [vmem:[#allocation6 + $0x64] sm:$0xf]
        %v334 = vld [vmem:[#allocation6 + $0x68] sm:$0xf]
        %v335 = vld [vmem:[#allocation6 + $0x6c] sm:$0xf]
        %v336 = vld [vmem:[#allocation6 + $0x70] sm:$0xf]
        %v337 = vld [vmem:[#allocation6 + $0x74] sm:$0xf]
        %v338 = vld [vmem:[#allocation6 + $0x78] sm:$0xf]
        %v339 = vld [vmem:[#allocation6 + $0x7c] sm:$0xf]
        %v340 = vld [vmem:[%s2] sm:$0x1]
        %v342 = vlaneseq
        %v343 = vshrl.u32 %v342, 7
        %v344 = vsub.s32 0, %v343
        %v345 = vrot.slane %v340, %v344
        %v351 = vunpack.c.l.b16 %v304
        %v352 = vunpack.c.h.b16 %v304
        %v353 = vunpack.c.l.b16 %v305
        %v354 = vunpack.c.h.b16 %v305
        %v355 = vunpack.c.l.b16 %v306
        %v356 = vunpack.c.h.b16 %v306
        %v357 = vunpack.c.l.b16 %v307
        %v358 = vunpack.c.h.b16 %v307
        %v359 = vpack.c.b16 %v353, %v351
        %v360 = vpack.c.b16 %v354, %v352
        %v361 = vpack.c.b16 %v357, %v355
        %v362 = vpack.c.b16 %v358, %v356
        %v399 = vunpack.c.l.b16 %v308
        %v400 = vunpack.c.l.b16 %v309
        %v401 = vunpack.c.l.b16 %v310
        %v402 = vunpack.c.l.b16 %v311
        %v403 = vunpack.c.l.b16 %v312
        %v404 = vunpack.c.l.b16 %v313
        %v405 = vunpack.c.l.b16 %v314
        %v406 = vunpack.c.l.b16 %v315
        %v407 = vunpack.c.l.b16 %v316
        %v408 = vunpack.c.l.b16 %v317
        %v409 = vunpack.c.l.b16 %v318
        %v410 = vunpack.c.l.b16 %v319
        %v411 = vunpack.c.l.b16 %v320
        %v412 = vunpack.c.l.b16 %v321
        %v413 = vunpack.c.l.b16 %v322
        %v414 = vunpack.c.l.b16 %v323
        %v415 = vunpack.c.l.b16 %v324
        %v416 = vunpack.c.l.b16 %v325
        %v417 = vunpack.c.l.b16 %v326
        %v418 = vunpack.c.l.b16 %v327
        %v419 = vunpack.c.l.b16 %v328
        %v420 = vunpack.c.l.b16 %v329
        %v421 = vunpack.c.l.b16 %v330
        %v422 = vunpack.c.l.b16 %v331
        %v423 = vunpack.c.l.b16 %v332
        %v424 = vunpack.c.l.b16 %v333
        %v425 = vunpack.c.l.b16 %v334
        %v426 = vunpack.c.l.b16 %v335
        %v427 = vunpack.c.l.b16 %v336
        %v428 = vunpack.c.l.b16 %v337
        %v429 = vunpack.c.l.b16 %v338
        %v430 = vunpack.c.l.b16 %v339
        %v431 = vpack.c.b16 %v400, %v399
        %v432 = vpack.c.b16 %v402, %v401
        %v433 = vpack.c.b16 %v404, %v403
        %v434 = vpack.c.b16 %v406, %v405
        %v435 = vpack.c.b16 %v408, %v407
        %v436 = vpack.c.b16 %v410, %v409
        %v437 = vpack.c.b16 %v412, %v411
        %v438 = vpack.c.b16 %v414, %v413
        %v439 = vpack.c.b16 %v416, %v415
        %v440 = vpack.c.b16 %v418, %v417
        %v441 = vpack.c.b16 %v420, %v419
        %v442 = vpack.c.b16 %v422, %v421
        %v443 = vpack.c.b16 %v424, %v423
        %v444 = vpack.c.b16 %v426, %v425
        %v445 = vpack.c.b16 %v428, %v427
        %v446 = vpack.c.b16 %v430, %v429
        %463 = vmatprep.subr.bf16.mxu0 0
        %464 = vmatpush1.bf16.msra.mxu0 %v431
        %465 = vmatprep.subr.bf16.mxu0 0
        %466 = vmatpush1.bf16.msra.mxu0 %v432
        %467 = vmatprep.subr.bf16.mxu0 0
        %468 = vmatpush1.bf16.msra.mxu0 %v433
        %469 = vmatprep.subr.bf16.mxu0 0
        %470 = vmatpush1.bf16.msra.mxu0 %v434
        %471 = vmatprep.subr.bf16.mxu0 0
        %472 = vmatpush1.bf16.msra.mxu0 %v435
        %473 = vmatprep.subr.bf16.mxu0 0
        %474 = vmatpush1.bf16.msra.mxu0 %v436
        %475 = vmatprep.subr.bf16.mxu0 0
        %476 = vmatpush1.bf16.msra.mxu0 %v437
        %477 = vmatprep.subr.bf16.mxu0 0
        %478 = vmatpush1.bf16.msra.mxu0 %v438
        %479 = vmatprep.subr.bf16.mxu0 0
        %480 = vmatpush1.bf16.msra.mxu0 %v439
        %481 = vmatprep.subr.bf16.mxu0 0
        %482 = vmatpush1.bf16.msra.mxu0 %v440
        %483 = vmatprep.subr.bf16.mxu0 0
        %484 = vmatpush1.bf16.msra.mxu0 %v441
        %485 = vmatprep.subr.bf16.mxu0 0
        %486 = vmatpush1.bf16.msra.mxu0 %v442
        %487 = vmatprep.subr.bf16.mxu0 0
        %488 = vmatpush1.bf16.msra.mxu0 %v443
        %489 = vmatprep.subr.bf16.mxu0 0
        %490 = vmatpush1.bf16.msra.mxu0 %v444
        %491 = vmatprep.subr.bf16.mxu0 0
        %492 = vmatpush1.bf16.msra.mxu0 %v445
        %493 = vmatprep.subr.bf16.mxu0 0
        %494 = vmatpush1.bf16.msra.mxu0 %v446
        %495 = vmatprep.mubr.bf16.mxu0 %v360
        %496 = vmatmul.mubr.bf16.gmra.mrb[0].mxu0 %v359
        %v497 = vpop.f32.mrb[0].mxu0
        %v498 = vadd.f32 %v345, %v497
        %v499 = vpop.f32.mrb[0].mxu0
        %v500 = vpop.f32.mrb[0].mxu0
        %v501 = vadd.f32 %v345, %v500
        %v502 = vpop.f32.mrb[0].mxu0
        %503 = vmatprep.mubr.bf16.mxu0 %v362
        %504 = vmatmul.mubr.bf16.gmra.mrb[0].mxu0 %v361
        %v505 = vpop.f32.mrb[0].mxu0
        %v506 = vadd.f32 %v345, %v505
        %v507 = vpop.f32.mrb[0].mxu0
        %v508 = vpop.f32.mrb[0].mxu0
        %v509 = vadd.f32 %v345, %v508
        %v510 = vpop.f32.mrb[0].mxu0
        %511 = vdwg.mxu0
        %v512 = vmax.f32 %v498, 0.0
        %v513 = vmax.f32 %v501, 0.0
        %v514 = vmax.f32 %v506, 0.0
        %v515 = vmax.f32 %v509, 0.0
        %516 = vst [vmem:[%s287] sm:$0xff] %v512
        %517 = vst [vmem:[%s287 + $0x8] sm:$0xff] %v513
        %518 = vst [vmem:[%s287 + $0x10] sm:$0xff] %v514
        %519 = vst [vmem:[%s287 + $0x18] sm:$0xff] %v515
        %v520 = vld [vmem:[%s3] sm:$0x1]
        %v522 = vlaneseq
        %v523 = vshrl.u32 %v522, 7
        %v524 = vsub.s32 0, %v523
        %v525 = vrot.slane %v520, %v524
        %v527 = vmul.f32 %v512, %v525
        %v528 = vmul.f32 %v513, %v525
        %v529 = vmul.f32 %v514, %v525
        %v530 = vmul.f32 %v515, %v525
        %531 = vadd.xlane.f32.xlu0 %v527
        %v532 = vpop.xlane.xlu0 %531
        %533 = vadd.xlane.f32.xlu0 %v528
        %v534 = vpop.xlane.xlu0 %533
        %535 = vadd.xlane.f32.xlu0 %v529
        %v536 = vpop.xlane.xlu0 %535
        %537 = vadd.xlane.f32.xlu0 %v530
        %v538 = vpop.xlane.xlu0 %537
        %s539 = sld [smem:[#allocation2]]
        %v540 = vstv %s539
        %v541 = vadd.f32 %v532, %v540
        %v542 = vadd.f32 %v534, %v540
        %v543 = vadd.f32 %v536, %v540
        %v544 = vadd.f32 %v538, %v540
        %v545 = vsub.f32 0.0, %v541
        %v546 = vsub.f32 0.0, %v542
        %v547 = vsub.f32 0.0, %v543
        %v548 = vsub.f32 0.0, %v544
        %v549 = vmul.f32 %v545, 1.442695
        %v550 = vpow.pop %v549
        %v551 = vmul.f32 %v546, 1.442695
        %v552 = vpow.pop %v551
        %v553 = vmul.f32 %v547, 1.442695
        %v554 = vpow.pop %v553
        %v555 = vmul.f32 %v548, 1.442695
        %v556 = vpow.pop %v555
        %v557 = vadd.f32 %v550, 1.0
        %v558 = vadd.f32 %v552, 1.0
        %v559 = vadd.f32 %v554, 1.0
        %v560 = vadd.f32 %v556, 1.0
        %v561 = vrcp.pop %v557
        %v562 = vrcp.pop %v558
        %v563 = vrcp.pop %v559
        %v564 = vrcp.pop %v560
        %vm565 = vcmask 7168
        %566 = vst.msk [vmem:[%s301] sm:$0xff] %vm565, %v561
        %567 = vst.msk [vmem:[%s301 + $0x8] sm:$0xff] %vm565, %v562
        %568 = vst.msk [vmem:[%s301 + $0x10] sm:$0xff] %vm565, %v563
        %569 = vst.msk [vmem:[%s301 + $0x18] sm:$0xff] %vm565, %v564
        %s570 = sand.u32 %s144, 1
        %s571 = scalar_lea.sflag [#allocation5], %s570
        %s572 = sand.u32 %s144, 1
        %s573 = smul.addr %s572, 32
        %s574 = scalar_lea.vmem [#allocation8], %s573
        %s575 = smul.u32 4, %s26
        %p576 = scmp.lt.s32.totalorder %s575, 7
        %s577 = scalar_select %p576, %s575, 7
        %s578 = smul.addr %s577, 8
        %s579 = scalar_lea.vmem %s6, %s578
        // Predicated region
        $region49: #{tpu_custom_call.1} parent=39 // pred_check
          %p580 = pneg %p154
        $region50: #{tpu_custom_call.1} parent=39 // pred_check_branch
          %582 = sbr.rel (%p580) target = $region52
        $region51: #{tpu_custom_call.1} parent=39 // pred_region
          %s583 = smul.u32 4, %s26
          %s585 = ssub.s32 512, 512
          %586 = vsyncadd %s571, %s585
          %s587 = smul.addr %s583, 128
          %s588 = scalar_lea.hbm %s5, %s587
          %s589 = sshll.u32 %s574, 4
          %s590 = int_to_ptr.vmem [resolvable:$true] %s589
          %595 = dma.vmem_to_hbm [thread:$0]  %s590, 512, %s588, %s571, 128, 128, 8
        $region52: #{tpu_custom_call.1} parent=39 // pred_fallthru
          _
        // Predicated region
        $region53: #{tpu_custom_call.1} parent=39 // pred_check
          %p596 = pneg %p180
        $region54: #{tpu_custom_call.1} parent=39 // pred_check_branch
          %598 = sbr.rel (%p596) target = $region56
        $region55: #{tpu_custom_call.1} parent=39 // pred_region
          %s599 = smul.u32 4, %s26
        $region56: #{tpu_custom_call.1} parent=39 // pred_fallthru
          _
      $region40: #{tpu_custom_call.1} parent=5 // pred_fallthru
        _
      %p600 = scmp.le.s32.totalorder 2, %s21
      // Predicated region
      $region57: #{tpu_custom_call.1} parent=5 // pred_check
        %p601 = pneg %p600
      $region58: #{tpu_custom_call.1} parent=5 // pred_check_branch
        %603 = sbr.rel (%p601) target = $region60
      $region59: #{tpu_custom_call.1} parent=5 // pred_region
        %s604 = ssub.s32 %s21, 2
        // Predicated region
        $region61: #{tpu_custom_call.1} parent=59 // pred_check
          %p605 = pneg %p160
        $region62: #{tpu_custom_call.1} parent=59 // pred_check_branch
          %607 = sbr.rel (%p605) target = $region64
        $region63: #{tpu_custom_call.1} parent=59 // pred_region
          %s608 = sand.u32 %s145, 1
          %s609 = scalar_lea.sflag [#allocation5], %s608
          %s610 = sand.u32 %s145, 1
          %s611 = smul.addr %s610, 32
          %s612 = scalar_lea.vmem [#allocation8], %s611
          %613 = dma.done %s609, 512
        $region64: #{tpu_custom_call.1} parent=59 // pred_fallthru
          _
        // Predicated region
        $region65: #{tpu_custom_call.1} parent=59 // pred_check
          %p614 = pneg %p186
        $region66: #{tpu_custom_call.1} parent=59 // pred_check_branch
          %616 = sbr.rel (%p614) target = $region68
        $region67: #{tpu_custom_call.1} parent=59 // pred_region
          %s617 = smul.u32 4, %s27
          %p618 = scmp.lt.s32.totalorder %s617, 7
          %s619 = scalar_select %p618, %s617, 7
          %s620 = smul.addr %s619, 8
          %s621 = scalar_lea.vmem %s6, %s620
        $region68: #{tpu_custom_call.1} parent=59 // pred_fallthru
          _
      $region60: #{tpu_custom_call.1} parent=5 // pred_fallthru
        _
    $region6: #{tpu_custom_call.1} parent=1 // loop_footer
      %s25 = sadd.s32 1, %s21
    $region7: #{tpu_custom_call.1} parent=1 // loop_footer_branch
      %20 = sbr.rel target = $region3
    $region8: #{tpu_custom_call.1} parent=1 // loop_exit
      _
    %622 = vsyncpa [#allocation4], 1
    %s623 = scalar_lea.sflag [#allocation4], 1
    %624 = vsyncpa %s623, 1
    %625 = vsyncpa [#allocation7], 1
    %626 = vsyncpa [#allocation5], 1
    %s627 = scalar_lea.sflag [#allocation5], 1
    %628 = vsyncpa %s627, 1

</llo_original>
